<compile_context>
chip_gen: v7x
topology: tpu7x:2x2x1
jax: 0.10.0
libtpu: 0.0.40
codegen_flags: <defaults>
</compile_context>

<pallas_src>
import functools

import jax
import jax.numpy as jnp
import numpy as np
from jax.experimental import pallas as pl
from jax.experimental.pallas import tpu as pltpu


def _center_loss_kernel(targets_ref, feats_ref, center_ref, loss_ref, acc_ref,
                        *, feat_dim):
    """One batch tile per grid step; accumulate masked SSE and real-row count."""
    step = pl.program_id(0)

    @pl.when(step == 0)
    def _init():
        acc_ref[0] = 0.0          # sum of squared error over "real" rows
        acc_ref[1] = 0.0          # number of "real" rows

    x = feats_ref[...]                                      # (TB, D) f32, lane-dense
    c = center_ref[...]                                     # (1, D)  f32 (resident)
    mask = (targets_ref[...] == 0).astype(jnp.float32)      # (TB, 1): 1.0 where real
    diff = x - c
    acc_ref[0] += jnp.sum(diff * diff * mask)
    acc_ref[1] += jnp.sum(mask)

    @pl.when(step == pl.num_programs(0) - 1)
    def _finalize():
        cnt = acc_ref[1]
        denom = jnp.maximum(cnt, 1.0) * feat_dim
        # Empty "real" set -> 0.0, else mean over all elements of real_feats.
        # TODO(synk): PyTorch returns a python float 0.0 in the empty case; here
        # it is a 0-valued f32 scalar (same semantics for downstream math).
        loss_ref[0, 0] = jnp.where(cnt > 0.0, acc_ref[0] / denom, 0.0)


def _round_up(x, m):
    return (x + m - 1) // m * m


def center_loss(feats, targets, center, *, max_block_rows=512):
    """loss = mse_loss(feats[targets == 0], center) ('mean'); 0.0 if no real rows."""
    B, D = feats.shape
    feats = feats.astype(jnp.float32)
    center = center.reshape(1, D).astype(jnp.float32)
    t = targets.astype(jnp.int32).reshape(B, 1)

    # Biggest batch tile that fits comfortably in VMEM (multiple of 8 sublanes).
    block_rows = min(max_block_rows, _round_up(B, 8))
    n_blocks = pl.cdiv(B, block_rows)
    padded_b = n_blocks * block_rows
    if padded_b != B:
        feats = jnp.pad(feats, ((0, padded_b - B), (0, 0)))
        # Padded rows get target=1 (non-real) so they contribute nothing.
        t = jnp.pad(t, ((0, padded_b - B), (0, 0)), constant_values=1)

    loss = pl.pallas_call(
        functools.partial(_center_loss_kernel, feat_dim=float(D)),
        out_shape=jax.ShapeDtypeStruct((1, 1), jnp.float32),
        grid_spec=pltpu.PrefetchScalarGridSpec(
            num_scalar_prefetch=0,
            grid=(n_blocks,),
            in_specs=[
                pl.BlockSpec((block_rows, 1), lambda i: (i, 0)),   # targets
                pl.BlockSpec((block_rows, D), lambda i: (i, 0)),   # feats (lane-dense)
                pl.BlockSpec((1, D), lambda i: (0, 0)),            # center (resident)
            ],
            out_specs=pl.BlockSpec(memory_space=pltpu.MemorySpace.SMEM),
            scratch_shapes=[pltpu.SMEM((2,), jnp.float32)],
        ),
        compiler_params=pltpu.CompilerParams(
            dimension_semantics=("arbitrary",)),   # reduction axis (accumulator)
    )(t, feats, center)
    return loss[0, 0]


if __name__ == "__main__":
    key = jax.random.PRNGKey(0)
    k_feats, k_targets, k_center = jax.random.split(key, 3)

    B, D = 16, 768    # module default input_dims=768; small batch
    feats = jax.random.normal(k_feats, (B, D), jnp.float32)
    targets = jax.random.randint(k_targets, (B,), 0, 2, jnp.int32)   # 0 = real, 1 = fake
    center = jax.random.normal(k_center, (D,), jnp.float32)          # nn.Parameter(torch.randn(d))

    loss_fn = jax.jit(center_loss)
    loss = loss_fn(feats, targets, center)
    jax.block_until_ready(loss)

    # Pure-numpy reference (boolean gather is fine outside the kernel).
    feats_np = np.asarray(feats)
    center_np = np.asarray(center)
    targets_np = np.asarray(targets)
    real = feats_np[targets_np == 0]
    ref = float(np.mean((real - center_np[None, :]) ** 2)) if real.shape[0] > 0 else 0.0
    np.testing.assert_allclose(np.asarray(loss), np.float32(ref), rtol=1e-5, atol=1e-5)

    # Empty "real" set path must return exactly 0.0.
    loss_empty = loss_fn(feats, jnp.ones((B,), jnp.int32), center)
    jax.block_until_ready(loss_empty)
    assert float(loss_empty) == 0.0

    print("KERNEL_OK")
</pallas_src>

<mosaic_0001>
module attributes {stable_mosaic.version = 11 : i64} {
  func.func @_center_loss_kernel(%arg0: i32, %arg1: memref<16x1xi32, #tpu.memory_space<vmem>>, %arg2: memref<16x768xf32, #tpu.memory_space<vmem>>, %arg3: memref<1x768xf32, #tpu.memory_space<vmem>>, %arg4: memref<1x1xf32, #tpu.memory_space<smem>>, %arg5: memref<2xf32, #tpu.memory_space<smem>>) attributes {dimension_semantics = [#tpu.dimension_semantics<arbitrary>], iteration_bounds = array<i64: 1>, scalar_prefetch = 0 : i64, scratch_operands = 1 : i64, tpu.core_type = #tpu.core_type<tc>, window_params = [{transform_indices = @transform_0, window_bounds = array<i64: 16, 1>}, {transform_indices = @transform_1, window_bounds = array<i64: 16, 768>}, {pipeline_mode = #tpu.pipeline_mode<synchronous>, transform_indices = @transform_2, window_bounds = array<i64: 1, 768>}, {transform_indices = @transform_3, window_bounds = array<i64: 1, 1>}]} {
    %c0_i32 = arith.constant 0 : i32
    %0 = arith.cmpi eq, %arg0, %c0_i32 : i32
    %1 = arith.extui %0 : i1 to i32
    %c0_i32_0 = arith.constant 0 : i32
    %2 = arith.cmpi ne, %1, %c0_i32_0 : i32
    scf.if %2 {
      %cst_13 = arith.constant 0.000000e+00 : f32
      %c0_14 = arith.constant 0 : index
      %32 = memref.load %arg5[%c0_14] : memref<2xf32, #tpu.memory_space<smem>>
      memref.store %cst_13, %arg5[%c0_14] : memref<2xf32, #tpu.memory_space<smem>>
      %cst_15 = arith.constant 0.000000e+00 : f32
      %c1_16 = arith.constant 1 : index
      %33 = memref.load %arg5[%c1_16] : memref<2xf32, #tpu.memory_space<smem>>
      memref.store %cst_15, %arg5[%c1_16] : memref<2xf32, #tpu.memory_space<smem>>
    } else {
    }
    %c0 = arith.constant 0 : index
    %c0_1 = arith.constant 0 : index
    %3 = vector.load %arg2[%c0, %c0_1] : memref<16x768xf32, #tpu.memory_space<vmem>>, vector<16x768xf32>
    %c0_2 = arith.constant 0 : index
    %c0_3 = arith.constant 0 : index
    %4 = vector.load %arg3[%c0_2, %c0_3] : memref<1x768xf32, #tpu.memory_space<vmem>>, vector<1x768xf32>
    %c0_4 = arith.constant 0 : index
    %c0_5 = arith.constant 0 : index
    %5 = vector.load %arg1[%c0_4, %c0_5] : memref<16x1xi32, #tpu.memory_space<vmem>>, vector<16x1xi32>
    %c0_i32_6 = arith.constant 0 : i32
    %6 = vector.broadcast %c0_i32_6 : i32 to vector<16x1xi32>
    %7 = arith.cmpi eq, %5, %6 : vector<16x1xi32>
    %8 = arith.extui %7 : vector<16x1xi1> to vector<16x1xi32>
    %9 = arith.sitofp %8 : vector<16x1xi32> to vector<16x1xf32>
    %10 = vector.broadcast %4 : vector<1x768xf32> to vector<16x768xf32>
    %11 = arith.subf %3, %10 : vector<16x768xf32>
    %c0_7 = arith.constant 0 : index
    %12 = memref.load %arg5[%c0_7] : memref<2xf32, #tpu.memory_space<smem>>
    %13 = arith.mulf %11, %11 : vector<16x768xf32>
    %14 = vector.broadcast %9 : vector<16x1xf32> to vector<16x768xf32>
    %15 = arith.mulf %13, %14 : vector<16x768xf32>
    %16 = vector.shape_cast %15 : vector<16x768xf32> to vector<1x16x768xf32>
    %cst = arith.constant dense<0.000000e+00> : vector<1xf32>
    %17 = vector.multi_reduction <add>, %16, %cst [1, 2] : vector<1x16x768xf32> to vector<1xf32>
    %18 = vector.shape_cast %17 : vector<1xf32> to vector<1x1x1xf32>
    %19 = vector.extract %18[0, 0, 0] : f32 from vector<1x1x1xf32>
    %20 = arith.addf %12, %19 : f32
    %c0_8 = arith.constant 0 : index
    %21 = memref.load %arg5[%c0_8] : memref<2xf32, #tpu.memory_space<smem>>
    memref.store %20, %arg5[%c0_8] : memref<2xf32, #tpu.memory_space<smem>>
    %c1 = arith.constant 1 : index
    %22 = memref.load %arg5[%c1] : memref<2xf32, #tpu.memory_space<smem>>
    %23 = vector.shape_cast %9 : vector<16x1xf32> to vector<1x16x1xf32>
    %cst_9 = arith.constant dense<0.000000e+00> : vector<1xf32>
    %24 = vector.multi_reduction <add>, %23, %cst_9 [1, 2] : vector<1x16x1xf32> to vector<1xf32>
    %25 = vector.shape_cast %24 : vector<1xf32> to vector<1x1x1xf32>
    %26 = vector.extract %25[0, 0, 0] : f32 from vector<1x1x1xf32>
    %27 = arith.addf %22, %26 : f32
    %c1_10 = arith.constant 1 : index
    %28 = memref.load %arg5[%c1_10] : memref<2xf32, #tpu.memory_space<smem>>
    memref.store %27, %arg5[%c1_10] : memref<2xf32, #tpu.memory_space<smem>>
    %c0_i32_11 = arith.constant 0 : i32
    %29 = arith.cmpi eq, %arg0, %c0_i32_11 : i32
    %30 = arith.extui %29 : i1 to i32
    %c0_i32_12 = arith.constant 0 : i32
    %31 = arith.cmpi ne, %30, %c0_i32_12 : i32
    scf.if %31 {
      %c1_13 = arith.constant 1 : index
      %32 = memref.load %arg5[%c1_13] : memref<2xf32, #tpu.memory_space<smem>>
      %cst_14 = arith.constant 1.000000e+00 : f32
      %33 = arith.maximumf %32, %cst_14 : f32
      %cst_15 = arith.constant 7.680000e+02 : f32
      %34 = arith.mulf %33, %cst_15 : f32
      %cst_16 = arith.constant 0.000000e+00 : f32
      %35 = arith.cmpf ogt, %32, %cst_16 : f32
      %c0_17 = arith.constant 0 : index
      %36 = memref.load %arg5[%c0_17] : memref<2xf32, #tpu.memory_space<smem>>
      %37 = arith.divf %36, %34 : f32
      %cst_18 = arith.constant 0.000000e+00 : f32
      %38 = arith.select %35, %37, %cst_18 : f32
      %c0_19 = arith.constant 0 : index
      %c0_20 = arith.constant 0 : index
      %39 = memref.load %arg4[%c0_19, %c0_20] : memref<1x1xf32, #tpu.memory_space<smem>>
      memref.store %38, %arg4[%c0_19, %c0_20] : memref<1x1xf32, #tpu.memory_space<smem>>
    } else {
    }
    return
  }
  func.func @transform_0(%arg0: i32) -> (i32, i32) {
    %c0_i32 = arith.constant 0 : i32
    %c0_i32_0 = arith.constant 0 : i32
    return %arg0, %c0_i32 : i32, i32
  }
  func.func @transform_1(%arg0: i32) -> (i32, i32) {
    %c0_i32 = arith.constant 0 : i32
    %c0_i32_0 = arith.constant 0 : i32
    return %arg0, %c0_i32 : i32, i32
  }
  func.func @transform_2(%arg0: i32) -> (i32, i32) {
    %c0_i32 = arith.constant 0 : i32
    %c0_i32_0 = arith.constant 0 : i32
    %c0_i32_1 = arith.constant 0 : i32
    return %c0_i32, %c0_i32_0 : i32, i32
  }
  func.func @transform_3(%arg0: i32) -> (i32, i32) {
    %c0_i32 = arith.constant 0 : i32
    %c0_i32_0 = arith.constant 0 : i32
    %c0_i32_1 = arith.constant 0 : i32
    return %c0_i32, %c0_i32_0 : i32, i32
  }
}

</mosaic_0001>

<llo_original>
// kernel: center_loss.1
$region0: #{center_loss.1}
  #allocation0 [shape = 'u32[]', space=smem, size = 0x4, offset = 0x4, fixed_abs, tag = 'smem constant byte address 0x4 - core index']
  #allocation1 [shape = 'u32[144,128]{1,0:T(1,128)}', space=vmem, size = 0x12000, scoped, tag = 'internal scratch']
  #allocation2 [shape = 'f32[2]{0:T(128)}', space=smem, size = 0x200, scoped, tag = 'scratch operand']
  %s0 = inlined_call_operand.vmem [shape: s32[16,1], index: 0, kind: input, shape index: {}]
  %s1 = inlined_call_operand.hbm [shape: f32[16,768], index: 1, kind: input, shape index: {}]
  %s2 = inlined_call_operand.vmem [shape: f32[1,768], index: 2, kind: input, shape index: {}]
  %s3 = inlined_call_operand.hbm [shape: f32[1,1], index: 3, kind: output, shape index: {}]
  %s4 = sld [smem:[#allocation0]]
  $region34: #{center_loss.1} parent=0
    _
  %s6 = ssub.s32 1, %s4
  %s7 = scalar_select 0, %s6, %s4
  $region1: #{center_loss.1} parent=0
    #allocation3 [shape = 'u8[49152]{0}', space=vmem, size = 0xc000, scoped, tag = 'input window, operand 1, single buffered']
    #allocation4 [shape = 's32[1]{0}', space=sflag, size = 0x4, scoped, tag = 'scoped memory for center_loss.1']
    #allocation5 [shape = 's32[1]{0}', space=sflag, size = 0x4, scoped, tag = 'scoped memory for center_loss.1']
    #allocation6 [shape = 'u8[512]{0}', space=smem, size = 0x200, scoped, tag = 'output window, operand 0, single buffered']
    %8 = vsyncpa [#allocation4], 0
    %9 = vsyncpa [#allocation5], 0
    // Predicated region
    $region2: #{center_loss.1} parent=1 // pred_check
      _
    $region3: #{center_loss.1} parent=1 // pred_check_branch
      %11 = sbr.rel (0) target = $region5
    $region4: #{center_loss.1} parent=1 // pred_region
      _
    $region5: #{center_loss.1} parent=1 // pred_fallthru
      _
    // Predicated region
    $region6: #{center_loss.1} parent=1 // pred_check
      _
    $region7: #{center_loss.1} parent=1 // pred_check_branch
      %13 = sbr.rel (0) target = $region9
    $region8: #{center_loss.1} parent=1 // pred_region
      %s15 = ssub.s32 1536, 1536
      %16 = vsyncadd [#allocation4], %s15
      %s17 = sshll.u32 [#allocation3], 4
      %s18 = int_to_ptr.vmem [resolvable:$true] %s17
      %23 = dma.hbm_to_vmem [thread:$0]  %s1, 1536, %s18, [#allocation4], 768, 768, 48
    $region9: #{center_loss.1} parent=1 // pred_fallthru
      _
    // Predicated region
    $region10: #{center_loss.1} parent=1 // pred_check
      _
    $region11: #{center_loss.1} parent=1 // pred_check_branch
      %25 = sbr.rel (0) target = $region13
    $region12: #{center_loss.1} parent=1 // pred_region
      _
    $region13: #{center_loss.1} parent=1 // pred_fallthru
      _
    // Predicated region
    $region14: #{center_loss.1} parent=1 // pred_check
      _
    $region15: #{center_loss.1} parent=1 // pred_check_branch
      %27 = sbr.rel (0) target = $region17
    $region16: #{center_loss.1} parent=1 // pred_region
      %28 = dma.done [#allocation4], 1536
    $region17: #{center_loss.1} parent=1 // pred_fallthru
      _
    %p29 = scmp.eq.s32.totalorder 0, 0
    // Predicated region
    $region18: #{center_loss.1} parent=1 // pred_check
      %p30 = pneg %p29
    $region19: #{center_loss.1} parent=1 // pred_check_branch
      %32 = sbr.rel (%p30) target = $region21
    $region20: #{center_loss.1} parent=1 // pred_region
      %s33 = scalar_lea.smem [#allocation2], 0
      %34 = sst [smem:[%s33]] 0.0
      %s35 = scalar_lea.smem [#allocation2], 1
      %36 = sst [smem:[%s35]] 0.0
    $region21: #{center_loss.1} parent=1 // pred_fallthru
      _
    %v37 = vld [vmem:[#allocation3] sm:$0xff]
    %v38 = vld [vmem:[#allocation3 + $0x8] sm:$0xff]
    %v39 = vld [vmem:[#allocation3 + $0x10] sm:$0xff]
    %v40 = vld [vmem:[#allocation3 + $0x18] sm:$0xff]
    %v41 = vld [vmem:[#allocation3 + $0x20] sm:$0xff]
    %v42 = vld [vmem:[#allocation3 + $0x28] sm:$0xff]
    %v43 = vld [vmem:[#allocation3 + $0x30] sm:$0xff]
    %v44 = vld [vmem:[#allocation3 + $0x38] sm:$0xff]
    %v45 = vld [vmem:[#allocation3 + $0x40] sm:$0xff]
    %v46 = vld [vmem:[#allocation3 + $0x48] sm:$0xff]
    %v47 = vld [vmem:[#allocation3 + $0x50] sm:$0xff]
    %v48 = vld [vmem:[#allocation3 + $0x58] sm:$0xff]
    %v49 = vld [vmem:[%s2] sm:$0x3f]
    %v50 = vld [vmem:[%s0] sm:$0xff]
    %v51 = vld [vmem:[%s0 + $0x8] sm:$0xff]
    %vm52 = vcmp.eq.s32.totalorder %v50, 0
    %vm53 = vcmp.eq.s32.totalorder %v51, 0
    %v54 = vsel %vm52, 1, 0
    %v55 = vsel %vm53, 1, 0
    %v56 = vcvt.s32.f32 %v54
    %v57 = vcvt.s32.f32 %v55
    %v59 = vlaneseq
    %v60 = vshrl.u32 %v59, 7
    %v61 = vsub.s32 0, %v60
    %v62 = vrot.slane %v49, %v61
    %v63 = vlaneseq
    %v64 = vshrl.u32 %v63, 7
    %v65 = vsub.s32 1, %v64
    %v66 = vrot.slane %v49, %v65
    %v67 = vlaneseq
    %v68 = vshrl.u32 %v67, 7
    %v69 = vsub.s32 2, %v68
    %v70 = vrot.slane %v49, %v69
    %v71 = vlaneseq
    %v72 = vshrl.u32 %v71, 7
    %v73 = vsub.s32 3, %v72
    %v74 = vrot.slane %v49, %v73
    %v75 = vlaneseq
    %v76 = vshrl.u32 %v75, 7
    %v77 = vsub.s32 4, %v76
    %v78 = vrot.slane %v49, %v77
    %v79 = vlaneseq
    %v80 = vshrl.u32 %v79, 7
    %v81 = vsub.s32 5, %v80
    %v82 = vrot.slane %v49, %v81
    %v89 = vsub.f32 %v37, %v62
    %v90 = vsub.f32 %v38, %v66
    %v91 = vsub.f32 %v39, %v70
    %v92 = vsub.f32 %v40, %v74
    %v93 = vsub.f32 %v41, %v78
    %v94 = vsub.f32 %v42, %v82
    %v95 = vsub.f32 %v43, %v62
    %v96 = vsub.f32 %v44, %v66
    %v97 = vsub.f32 %v45, %v70
    %v98 = vsub.f32 %v46, %v74
    %v99 = vsub.f32 %v47, %v78
    %v100 = vsub.f32 %v48, %v82
    %s101 = sld [smem:[#allocation2]]
    %v102 = vmul.f32 %v89, %v89
    %v103 = vmul.f32 %v90, %v90
    %v104 = vmul.f32 %v91, %v91
    %v105 = vmul.f32 %v92, %v92
    %v106 = vmul.f32 %v93, %v93
    %v107 = vmul.f32 %v94, %v94
    %v108 = vmul.f32 %v95, %v95
    %v109 = vmul.f32 %v96, %v96
    %v110 = vmul.f32 %v97, %v97
    %v111 = vmul.f32 %v98, %v98
    %v112 = vmul.f32 %v99, %v99
    %v113 = vmul.f32 %v100, %v100
    %115 = vset.pattern.permute.xlu0 0
    %116 = vperm.xlu0 %115, %v56
    %v117 = vpop.permute.xlu0 %116
    %120 = vset.pattern.permute.xlu0 0
    %121 = vperm.xlu0 %120, %v57
    %v122 = vpop.permute.xlu0 %121
    %v124 = vmul.f32 %v102, %v117
    %v125 = vmul.f32 %v103, %v117
    %v126 = vmul.f32 %v104, %v117
    %v127 = vmul.f32 %v105, %v117
    %v128 = vmul.f32 %v106, %v117
    %v129 = vmul.f32 %v107, %v117
    %v130 = vmul.f32 %v108, %v122
    %v131 = vmul.f32 %v109, %v122
    %v132 = vmul.f32 %v110, %v122
    %v133 = vmul.f32 %v111, %v122
    %v134 = vmul.f32 %v112, %v122
    %v135 = vmul.f32 %v113, %v122
    %v136 = vadd.f32 %v124, %v125
    %v137 = vadd.f32 %v136, %v126
    %v138 = vadd.f32 %v137, %v127
    %v139 = vadd.f32 %v138, %v128
    %v140 = vadd.f32 %v139, %v129
    %v141 = vadd.f32 %v140, %v130
    %v142 = vadd.f32 %v141, %v131
    %v143 = vadd.f32 %v142, %v132
    %v144 = vadd.f32 %v143, %v133
    %v145 = vadd.f32 %v144, %v134
    %v146 = vadd.f32 %v145, %v135
    %147 = vadd.xlane.f32.xlu0 %v146
    %v148 = vpop.xlane.xlu0 %147
    %v149 = vrot.slane %v148, 4
    %v150 = vadd.f32 %v148, %v149
    %v151 = vrot.slane %v150, 2
    %v152 = vadd.f32 %v150, %v151
    %v153 = vrot.slane %v152, 1
    %v154 = vadd.f32 %v152, %v153
    %s155 = vtos %v154
    %s156 = sadd.f32 %s101, %s155
    %s157 = scalar_lea.smem [#allocation2], 0
    %158 = sst [smem:[%s157]] %s156
    %s159 = sld [smem:[#allocation2 + $0x1]]
    %vm160 = vcmask 7168
    %v161 = vsel %vm160, %v56, 0.0
    %v162 = vsel %vm160, %v57, 0.0
    %v163 = vadd.f32 %v161, %v162
    %164 = vadd.xlane.f32.xlu0 %v163
    %v165 = vpop.xlane.xlu0 %164
    %v166 = vrot.slane %v165, 4
    %v167 = vadd.f32 %v165, %v166
    %v168 = vrot.slane %v167, 2
    %v169 = vadd.f32 %v167, %v168
    %v170 = vrot.slane %v169, 1
    %v171 = vadd.f32 %v169, %v170
    %s172 = vtos %v171
    %s173 = sadd.f32 %s159, %s172
    %s174 = scalar_lea.smem [#allocation2], 1
    %175 = sst [smem:[%s174]] %s173
    // Predicated region
    $region22: #{center_loss.1} parent=1 // pred_check
      %p176 = pneg %p29
    $region23: #{center_loss.1} parent=1 // pred_check_branch
      %178 = sbr.rel (%p176) target = $region25
    $region24: #{center_loss.1} parent=1 // pred_region
      %s179 = sld [smem:[#allocation2 + $0x1]]
      %s180 = smax.f32 %s179, 1.0
      %s181 = smul.f32 %s180, 768.0
      %p182 = scmp.gt.f32.partialorder %s179, 0.0
      %s183 = sld [smem:[#allocation2]]
      %v184 = vstv %s181
      %v185 = vrcp.pop %v184
      %s186 = vtos %v185
      %s187 = smul.f32 %s183, %s186
      %s188 = scalar_select %p182, %s187, 0.0
      %s189 = scalar_lea.smem [#allocation6], 0
      %190 = sst [smem:[%s189]] %s188
    $region25: #{center_loss.1} parent=1 // pred_fallthru
      _
    // Predicated region
    $region26: #{center_loss.1} parent=1 // pred_check
      _
    $region27: #{center_loss.1} parent=1 // pred_check_branch
      %192 = sbr.rel (0) target = $region29
    $region28: #{center_loss.1} parent=1 // pred_region
      %s194 = ssub.s32 16, 16
      %195 = vsyncadd [#allocation5], %s194
      %198 = dma.smem_to_hbm [#allocation6], 16, %s3, [#allocation5]
    $region29: #{center_loss.1} parent=1 // pred_fallthru
      _
    // Predicated region
    $region30: #{center_loss.1} parent=1 // pred_check
      _
    $region31: #{center_loss.1} parent=1 // pred_check_branch
      %200 = sbr.rel (0) target = $region33
    $region32: #{center_loss.1} parent=1 // pred_region
      %201 = dma.done [#allocation5], 16
    $region33: #{center_loss.1} parent=1 // pred_fallthru
      _
    %202 = sfence
    %203 = vsyncpa [#allocation4], 1
    %204 = vsyncpa [#allocation5], 1

</llo_original>
